<compile_context>
chip_gen: v7x
topology: tpu7x:2x2x1
jax: 0.10.0
libtpu: 0.0.40
codegen_flags: <defaults>
</compile_context>

<pallas_src>
import functools
import math

import numpy as np
import jax
import jax.numpy as jnp
from jax import lax
from jax.experimental import pallas as pl
from jax.experimental.pallas import tpu as pltpu

EPS = 1e-12
LN_EPS = 1e-5

_ROW_TILE = 512        # max row tile for 2-D matmul kernels
_TIME_TILE = 512       # time tile for blocked cLN (multiple of 128)


# ------------------------------------------------------------------ VMEM budget / tiles
def _detect_vmem_cap():
    try:
        info = pltpu.get_tpu_info()
        cap = getattr(info, "vmem_capacity_bytes", None)
        if cap:
            return int(cap)
    except Exception:
        pass
    return 128 << 20                     # v5e/v6e; v7x (64 MiB) is picked up via get_tpu_info


_VMEM_CAP = _detect_vmem_cap()
_VMEM_LIMIT = int(0.75 * _VMEM_CAP)      # explicit scoped-VMEM limit for every pallas_call
_VMEM_BUDGET = int(0.30 * _VMEM_CAP)     # per-block sizing budget (x2 for double buffering)


def _cparams(*sems):
    return pltpu.CompilerParams(dimension_semantics=sems, vmem_limit_bytes=_VMEM_LIMIT)


def _tile(full, cap, align=8):
    """Largest tile <= cap, multiple of `align`, small enough that the grid has >= 2
    steps (so v7x's second TensorCore gets work).  Returns the full dim when it is too
    small to split (always a legal full-array block)."""
    if full <= align:
        return full
    half = -(-((full + 1) // 2) // align) * align
    t = min(cap, half, full)
    t = max(align, (t // align) * align)
    return min(t, full)


def _row_tile(m, k, n, in_bytes=4, out_bytes=4):
    fixed = 2 * (k * n * 2)                                   # bf16 weight x 2 buffers
    per_row = 2 * (k * in_bytes + n * out_bytes) + 8 * n      # in/out blocks + transients
    avail = max(_VMEM_BUDGET - fixed, 8 * per_row)
    cap = min(_ROW_TILE, max(8, (avail // per_row) // 8 * 8))
    return _tile(m, cap)


def _attn_batch_tile(nh, l, c, dh):
    # bf16 qkv / out blocks (x2 buffers) + per-head f32 transients (scores, probs, slices)
    per_row = 4 * (l * 3 * c) + 4 * (l * c) + 4 * (2 * l * l + 4 * l * dh)
    cap = max(8, (_VMEM_BUDGET // max(per_row, 1)) // 8 * 8)
    return _tile(nh, cap)


def _lstm_batch_tile(n, l, hidden, ndir):
    per_row = ndir * 2 * (l * 4 * hidden * 4)     # gx blocks (f32) x 2 buffers
    per_row += 2 * (l * ndir * hidden * 4)        # output block x 2 buffers
    per_row += 64 * hidden                        # per-step transients
    cap = max(8, (_VMEM_BUDGET // max(per_row, 1)) // 8 * 8)
    return _tile(n, cap)


# ----------------------------------------------------------------------- linear kernel
def _linear_kernel(x_ref, w_ref, b_ref, o_ref, *, act):
    x = x_ref[...]
    if act == "relu":
        x = jnp.maximum(x, 0.0)
    y = jnp.dot(x.astype(jnp.bfloat16), w_ref[...], preferred_element_type=jnp.float32)
    o_ref[...] = (y + b_ref[...]).astype(o_ref.dtype)


@functools.partial(jax.jit, static_argnames=("act", "out_dtype"))
def pallas_linear(x, w, b, act=None, out_dtype=jnp.float32):
    m, k = x.shape
    n = w.shape[1]
    tm = _row_tile(m, k, n, in_bytes=x.dtype.itemsize,
                   out_bytes=np.dtype(out_dtype).itemsize)
    return pl.pallas_call(
        functools.partial(_linear_kernel, act=act),
        out_shape=jax.ShapeDtypeStruct((m, n), out_dtype),
        grid=(pl.cdiv(m, tm),),
        in_specs=[
            pl.BlockSpec((tm, k), lambda i: (i, 0)),
            pl.BlockSpec((k, n), lambda i: (0, 0)),
            pl.BlockSpec((1, n), lambda i: (0, 0)),
        ],
        out_specs=pl.BlockSpec((tm, n), lambda i: (i, 0)),
        compiler_params=_cparams("parallel"),
    )(x, w.astype(jnp.bfloat16), b.reshape(1, n))


# ---------------------------------------------- linear + residual + LayerNorm (fused)
def _linear_res_ln_kernel(x_ref, w_ref, b_ref, r_ref, ga_ref, be_ref, o_ref, *, act, eps):
    x = x_ref[...]
    if act == "relu":
        x = jnp.maximum(x, 0.0)
    h = jnp.dot(x.astype(jnp.bfloat16), w_ref[...], preferred_element_type=jnp.float32)
    h = h + b_ref[...] + r_ref[...]
    mu = jnp.mean(h, axis=-1, keepdims=True)
    var = jnp.mean((h - mu) ** 2, axis=-1, keepdims=True)
    o_ref[...] = (h - mu) * lax.rsqrt(var + eps) * ga_ref[...] + be_ref[...]


@functools.partial(jax.jit, static_argnames=("act",))
def pallas_linear_res_ln(x, w, b, res, gamma, beta, act=None):
    m, k = x.shape
    n = w.shape[1]
    tm = _row_tile(m, k, n, in_bytes=x.dtype.itemsize)
    return pl.pallas_call(
        functools.partial(_linear_res_ln_kernel, act=act, eps=LN_EPS),
        out_shape=jax.ShapeDtypeStruct((m, n), jnp.float32),
        grid=(pl.cdiv(m, tm),),
        in_specs=[
            pl.BlockSpec((tm, k), lambda i: (i, 0)),
            pl.BlockSpec((k, n), lambda i: (0, 0)),
            pl.BlockSpec((1, n), lambda i: (0, 0)),
            pl.BlockSpec((tm, n), lambda i: (i, 0)),
            pl.BlockSpec((1, n), lambda i: (0, 0)),
            pl.BlockSpec((1, n), lambda i: (0, 0)),
        ],
        out_specs=pl.BlockSpec((tm, n), lambda i: (i, 0)),
        compiler_params=_cparams("parallel"),
    )(x, w.astype(jnp.bfloat16), b.reshape(1, n), res,
      gamma.reshape(1, n), beta.reshape(1, n))


# ------------------------------------------------------------- batched attention kernel
def _attn_kernel(qkv_ref, o_ref, *, scale, causal, heads, dh):
    qkv = qkv_ref[...]                                        # (G, L, 3C) bf16
    l = qkv.shape[1]
    c = heads * dh
    if causal:
        row = lax.broadcasted_iota(jnp.int32, (l, l), 0)
        col = lax.broadcasted_iota(jnp.int32, (l, l), 1)
        neg = jnp.where(col <= row, 0.0, -1e30)[None, :, :]
    outs = []
    for h in range(heads):                                    # static loop over heads
        q = qkv[:, :, h * dh:(h + 1) * dh]
        k = qkv[:, :, c + h * dh:c + (h + 1) * dh]
        v = qkv[:, :, 2 * c + h * dh:2 * c + (h + 1) * dh]
        s = jnp.einsum("bld,bmd->blm", q, k,
                       preferred_element_type=jnp.float32) * scale
        if causal:
            s = s + neg
        s = s - jnp.max(s, axis=-1, keepdims=True)
        p = jnp.exp(s)
        p = p * pl.reciprocal(jnp.sum(p, axis=-1, keepdims=True), approx=True)
        outs.append(jnp.einsum("blm,bmd->bld", p.astype(jnp.bfloat16), v,
                               preferred_element_type=jnp.float32))
    # single lane-dense store in the (N, L, C) layout the out-projection consumes
    o_ref[...] = jnp.concatenate(outs, axis=-1).astype(o_ref.dtype)


@functools.partial(jax.jit, static_argnames=("causal", "num_heads"))
def pallas_attention(qkv, *, causal, num_heads):
    # qkv: (n_seq, L, 3C) bf16 -- heads are sliced inside the kernel, no relayouts.
    # TODO(synk): for very large L, add an L-tile (flash-style key streaming).
    n, l, c3 = qkv.shape
    c = c3 // 3
    dh = c // num_heads
    scale = 1.0 / math.sqrt(dh)
    gb = _attn_batch_tile(n, l, c, dh)
    return pl.pallas_call(
        functools.partial(_attn_kernel, scale=scale, causal=causal,
                          heads=num_heads, dh=dh),
        out_shape=jax.ShapeDtypeStruct((n, l, c), jnp.bfloat16),
        grid=(pl.cdiv(n, gb),),
        in_specs=[pl.BlockSpec((gb, l, c3), lambda i: (i, 0, 0))],
        out_specs=pl.BlockSpec((gb, l, c), lambda i: (i, 0, 0)),
        compiler_params=_cparams("parallel"),
    )(qkv)


# -------------------------------------------------------- blocked cumulative LayerNorm
def _cln_kernel(x_ref, g_ref, b_ref, triu_ref, o_ref, sum_c, sq_c, *, eps, c_total, tt):
    ti = pl.program_id(0)

    @pl.when(ti == 0)
    def _():
        sum_c[...] = jnp.zeros_like(sum_c)
        sq_c[...] = jnp.zeros_like(sq_c)

    x = x_ref[...]                                            # (B, C, TT)
    bsz = x.shape[0]
    step_sum = jnp.sum(x, axis=1)                             # (B, TT)
    step_sq = jnp.sum(x * x, axis=1)
    # single stacked prefix-sum matmul against the precomputed triangular matrix
    stacked = jnp.concatenate([step_sum, step_sq], axis=0)    # (2B, TT)
    cum = jnp.dot(stacked, triu_ref[...], preferred_element_type=jnp.float32)
    cum_sum = cum[:bsz] + sum_c[...]
    cum_sq = cum[bsz:] + sq_c[...]
    pos = (lax.broadcasted_iota(jnp.int32, (1, tt), 1) + (ti * tt + 1)).astype(jnp.float32)
    denom = pos * c_total
    cum_mean = cum_sum / denom                                # exact division (no approx)
    cum_var = jnp.maximum(cum_sq / denom - cum_mean * cum_mean, 0.0)
    inv_std = lax.rsqrt(cum_var + eps)
    o_ref[...] = (x - cum_mean[:, None, :]) * inv_std[:, None, :] * g_ref[...] + b_ref[...]
    # NOTE: carrying the last column is only safe because a partial tile can only be
    # the last tile of the "arbitrary" time axis.
    sum_c[...] = cum_sum[:, tt - 1:tt]
    sq_c[...] = cum_sq[:, tt - 1:tt]


@jax.jit
def pallas_cln(x, gamma, beta):
    b, c, t = x.shape
    tt = t if t <= _TIME_TILE else _TIME_TILE
    triu = jnp.triu(jnp.ones((tt, tt), jnp.float32))
    return pl.pallas_call(
        functools.partial(_cln_kernel, eps=EPS, c_total=float(c), tt=tt),
        out_shape=jax.ShapeDtypeStruct((b, c, t), jnp.float32),
        grid=(pl.cdiv(t, tt),),
        in_specs=[
            pl.BlockSpec((b, c, tt), lambda i: (0, 0, i)),
            pl.BlockSpec((1, c, 1), lambda i: (0, 0, 0)),
            pl.BlockSpec((1, c, 1), lambda i: (0, 0, 0)),
            pl.BlockSpec((tt, tt), lambda i: (0, 0)),
        ],
        out_specs=pl.BlockSpec((b, c, tt), lambda i: (0, 0, i)),
        scratch_shapes=[pltpu.VMEM((b, 1), jnp.float32),
                        pltpu.VMEM((b, 1), jnp.float32)],
        compiler_params=_cparams("arbitrary"),
    )(x, gamma, beta, triu)


# ---------------------------------------------------------------- LSTM recurrence kernel
def _lstm_kernel(*refs, hidden, bidirectional):
    if bidirectional:
        gx_f_ref, gx_b_ref, whh_f_ref, whh_b_ref, o_ref = refs
    else:
        gx_f_ref, whh_f_ref, o_ref = refs
        gx_b_ref = whh_b_ref = None
    gn = gx_f_ref.shape[0]
    l = gx_f_ref.shape[1]
    whh_f = whh_f_ref[...]
    whh_b = whh_b_ref[...] if bidirectional else None

    def cell(gx, h_p, c_p, whh):
        g = gx + jnp.dot(h_p.astype(jnp.bfloat16), whh, preferred_element_type=jnp.float32)
        i_g = jax.nn.sigmoid(g[:, :hidden])
        f_g = jax.nn.sigmoid(g[:, hidden:2 * hidden])
        g_g = jnp.tanh(g[:, 2 * hidden:3 * hidden])
        o_g = jax.nn.sigmoid(g[:, 3 * hidden:])
        c_n = f_g * c_p + i_g * g_g
        h_n = o_g * jnp.tanh(c_n)
        return h_n, c_n

    def step(t, carry):
        # two independent recurrences per iteration (forward + reverse) to hide the
        # serial step latency of each chain
        h_f, c_f, h_b, c_b = carry
        gxf = gx_f_ref[:, pl.ds(t, 1), :][:, 0, :]
        h_f, c_f = cell(gxf, h_f, c_f, whh_f)
        o_ref[:, pl.ds(t, 1), :hidden] = h_f[:, None, :].astype(o_ref.dtype)
        if bidirectional:
            rt = l - 1 - t
            gxb = gx_b_ref[:, pl.ds(rt, 1), :][:, 0, :]
            h_b, c_b = cell(gxb, h_b, c_b, whh_b)
            o_ref[:, pl.ds(rt, 1), hidden:] = h_b[:, None, :].astype(o_ref.dtype)
        return (h_f, c_f, h_b, c_b)

    z = jnp.zeros((gn, hidden), jnp.float32)
    lax.fori_loop(0, l, step, (z, z, z, z))


@functools.partial(jax.jit, static_argnames=("bidirectional",))
def pallas_lstm(gx_f, gx_b, w_hh_f, w_hh_b, *, bidirectional):
    # gx_*: (N, L, 4H) input-gate projections (biases included) -- no time transpose.
    n, l, g4 = gx_f.shape
    hidden = g4 // 4
    ndir = 2 if bidirectional else 1
    gn = _lstm_batch_tile(n, l, hidden, ndir)
    in_specs = [pl.BlockSpec((gn, l, g4), lambda i: (i, 0, 0))]
    args = [gx_f]
    if bidirectional:
        in_specs.append(pl.BlockSpec((gn, l, g4), lambda i: (i, 0, 0)))
        args.append(gx_b)
    in_specs.append(pl.BlockSpec((hidden, g4), lambda i: (0, 0)))
    args.append(w_hh_f.astype(jnp.bfloat16))
    if bidirectional:
        in_specs.append(pl.BlockSpec((hidden, g4), lambda i: (0, 0)))
        args.append(w_hh_b.astype(jnp.bfloat16))
    return pl.pallas_call(
        functools.partial(_lstm_kernel, hidden=hidden, bidirectional=bidirectional),
        out_shape=jax.ShapeDtypeStruct((n, l, ndir * hidden), jnp.float32),
        grid=(pl.cdiv(n, gn),),
        in_specs=in_specs,
        out_specs=pl.BlockSpec((gn, l, ndir * hidden), lambda i: (i, 0, 0)),
        compiler_params=_cparams("parallel"),
    )(*args)


def lstm(x, p, *, bidirectional):
    # TODO(synk): store gx in bf16 and stream time-blocked (P4) once dynamic sublane
    # slices on packed dtypes are guaranteed; halves gx HBM/VMEM traffic.
    n, l, c = x.shape
    xf = x.reshape(n * l, c)
    h4 = p["w_ih"].shape[1]
    gx_f = pallas_linear(xf, p["w_ih"], p["b_ih"] + p["b_hh"]).reshape(n, l, h4)
    gx_b = None
    w_hh_b = None
    if bidirectional:
        gx_b = pallas_linear(xf, p["w_ih_r"], p["b_ih_r"] + p["b_hh_r"]).reshape(n, l, h4)
        w_hh_b = p["w_hh_r"]
    return pallas_lstm(gx_f, gx_b, p["w_hh"], w_hh_b, bidirectional=bidirectional)


# ------------------------------------------- PReLU + map conv + GTU + mask ReLU (fused)
def _mask_head_kernel(a_ref, y_ref, wm_ref, bm_ref, w12_ref, b12_ref, o_ref, *, f, n_sources):
    y = y_ref[...]
    a = a_ref[0]                                              # PReLU slope from SMEM
    y = jnp.where(y >= 0.0, y, a * y)
    m = jnp.dot(y.astype(jnp.bfloat16), wm_ref[...],
                preferred_element_type=jnp.float32) + bm_ref[...]         # (TM, nS*F)
    outs = []
    for s in range(n_sources):                                # static source loop
        pre = jnp.dot(m[:, s * f:(s + 1) * f].astype(jnp.bfloat16), w12_ref[...],
                      preferred_element_type=jnp.float32) + b12_ref[...]  # (TM, 2F)
        h = jnp.tanh(pre[:, :f])
        g = jax.nn.sigmoid(pre[:, f:])
        outs.append(jnp.maximum(h * g, 0.0))
    o_ref[...] = jnp.concatenate(outs, axis=-1)               # single lane-dense store


@functools.partial(jax.jit, static_argnames=("n_sources", "f"))
def pallas_mask_head(y, a, wm, bm, w12, b12, *, n_sources, f):
    m, c = y.shape
    nout = n_sources * f
    tm = _row_tile(m, c, nout + 2 * f)
    return pl.pallas_call(
        functools.partial(_mask_head_kernel, f=f, n_sources=n_sources),
        out_shape=jax.ShapeDtypeStruct((m, nout), jnp.float32),
        grid=(pl.cdiv(m, tm),),
        in_specs=[
            pl.BlockSpec(memory_space=pltpu.MemorySpace.SMEM),            # prelu slope (1,)
            pl.BlockSpec((tm, c), lambda i: (i, 0)),
            pl.BlockSpec((c, nout), lambda i: (0, 0)),
            pl.BlockSpec((1, nout), lambda i: (0, 0)),
            pl.BlockSpec((f, 2 * f), lambda i: (0, 0)),
            pl.BlockSpec((1, 2 * f), lambda i: (0, 0)),
        ],
        out_specs=pl.BlockSpec((tm, nout), lambda i: (i, 0)),
        compiler_params=_cparams("parallel"),
    )(a, y, wm.astype(jnp.bfloat16), bm.reshape(1, nout),
      w12.astype(jnp.bfloat16), b12.reshape(1, 2 * f))


# --------------------------------------------------------------------- transformer glue
def improved_transformer(x, p, *, causal, num_heads):
    # DPTNet improved transformer: MHA + (res, LN), LSTM -> ReLU -> Linear + (res, LN).
    n, l, c = x.shape
    ap = p["attn"]
    xf = x.reshape(n * l, c)

    # Fused QKV projection -> bf16; attention consumes the un-transposed (N, L, 3C)
    # tensor directly (heads sliced in-kernel) and returns (N, L, C) -- no relayouts.
    qkv = pallas_linear(xf, ap["w_in"], ap["b_in"],
                        out_dtype=jnp.bfloat16).reshape(n, l, 3 * c)
    o = pallas_attention(qkv, causal=causal, num_heads=num_heads)     # (N, L, C) bf16

    # out-projection + residual + LayerNorm fused (residual kept in f32)
    x1 = pallas_linear_res_ln(o.reshape(n * l, c), ap["w_out"], ap["b_out"], xf,
                              p["ln1_g"], p["ln1_b"])

    rnn = lstm(x1.reshape(n, l, c), p["lstm"], bidirectional=p["bidirectional"])
    # FFN (ReLU -> Linear) + residual + LayerNorm fused
    x2 = pallas_linear_res_ln(rnn.reshape(n * l, rnn.shape[-1]),
                              p["fc_w"], p["fc_b"], x1, p["ln2_g"], p["ln2_b"], act="relu")
    return x2.reshape(n, l, c)


def dpt_block(x4, blk, *, causal, num_heads):
    b, c, s, k = x4.shape
    # intra-chunk: sequences along chunk axis, bidirectional
    seq = x4.transpose(0, 2, 3, 1).reshape(b * s, k, c)
    seq = improved_transformer(seq, blk["intra"], causal=False, num_heads=num_heads)
    x4 = seq.reshape(b, s, k, c).transpose(0, 3, 1, 2)
    # inter-chunk: sequences along chunk index axis, causal when configured
    seq = x4.transpose(0, 3, 2, 1).reshape(b * k, s, c)
    seq = improved_transformer(seq, blk["inter"], causal=causal, num_heads=num_heads)
    x4 = seq.reshape(b, k, s, c).transpose(0, 3, 2, 1)
    return x4


# --------------------------------------------------------------------------- Separator
def separator_forward(params, cfg, x):
    b, f, t = x.shape
    chunk, hop = cfg["chunk_size"], cfg["hop_size"]
    n_sources = cfg["n_sources"]
    num_heads = cfg["num_heads"]
    causal = cfg["causal"]

    padding = (hop - (t - chunk) % hop) % hop
    pad_l = padding // 2
    pad_r = padding - pad_l

    # bottleneck 1x1 Conv1d (Pallas matmul)
    h = pallas_linear(x.transpose(0, 2, 1).reshape(b * t, f),
                      params["bottleneck_w"], params["bottleneck_b"])
    c = h.shape[1]
    h = h.reshape(b, t, c).transpose(0, 2, 1)                          # (B, C, T)
    h = jnp.pad(h, ((0, 0), (0, 0), (pad_l, pad_r)))
    tp = t + padding
    s = (tp - chunk) // hop + 1

    if 2 * hop == chunk:
        # Segment1d as pure reshape/concat: segment s = h[:, :, s*hop : s*hop+chunk]
        hr = h.reshape(b, c, tp // hop, hop)
        xs = jnp.concatenate([hr[:, :, :-1, :], hr[:, :, 1:, :]], axis=-1)  # (B,C,S,chunk)
    else:
        # TODO(synk): general hop still uses an XLA gather.
        idx = hop * jnp.arange(s)[:, None] + jnp.arange(chunk)[None, :]
        xs = h[:, :, idx]

    # TODO(synk): only the causal (cLN) norm is implemented; non-causal gLN not ported.
    flat = pallas_cln(xs.reshape(b, c, s * chunk), params["norm_gamma"], params["norm_beta"])
    xs = flat.reshape(b, c, s, chunk)

    # DualPathTransformer
    for blk in params["blocks"]:
        xs = dpt_block(xs, blk, causal=causal, num_heads=num_heads)

    if 2 * hop == chunk:
        # OverlapAdd1d as two shifted pads + add (no scatter-add)
        first = xs[..., :hop].reshape(b, c, s * hop)
        second = xs[..., hop:].reshape(b, c, s * hop)
        y = (jnp.pad(first, ((0, 0), (0, 0), (0, hop)))
             + jnp.pad(second, ((0, 0), (0, 0), (hop, 0))))
    else:
        idx = hop * jnp.arange(s)[:, None] + jnp.arange(chunk)[None, :]
        y = jnp.zeros((b, c, tp), jnp.float32).at[:, :, idx].add(xs)
    y = y[:, :, pad_l: tp - pad_r]                                     # (B, C, T)

    # PReLU + map 1x1 Conv1d + GTU + mask ReLU (single fused Pallas kernel)
    w12 = jnp.concatenate([params["gtu_w1"], params["gtu_w2"]], axis=1)
    b12 = jnp.concatenate([params["gtu_b1"], params["gtu_b2"]], axis=0)
    g = pallas_mask_head(y.transpose(0, 2, 1).reshape(b * t, c), params["prelu_a"],
                         params["map_w"], params["map_b"], w12, b12,
                         n_sources=n_sources, f=f)
    return g.reshape(b, t, n_sources, f).transpose(0, 2, 3, 1)         # (B, nS, F, T)


# ------------------------------------------------------------------------------- init
def _uinit(key, shape, fan_in):
    bound = 1.0 / math.sqrt(fan_in)
    return jax.random.uniform(key, shape, jnp.float32, -bound, bound)


def init_transformer_params(key, c, h, bidirectional):
    ks = jax.random.split(key, 14)
    out_h = 2 * h if bidirectional else h
    return dict(
        attn=dict(
            w_in=_uinit(ks[0], (c, 3 * c), c), b_in=_uinit(ks[1], (3 * c,), c),
            w_out=_uinit(ks[2], (c, c), c), b_out=_uinit(ks[3], (c,), c),
        ),
        ln1_g=jnp.ones((1, c), jnp.float32), ln1_b=jnp.zeros((1, c), jnp.float32),
        lstm=dict(
            w_ih=_uinit(ks[4], (c, 4 * h), h), w_hh=_uinit(ks[5], (h, 4 * h), h),
            b_ih=_uinit(ks[6], (4 * h,), h), b_hh=_uinit(ks[7], (4 * h,), h),
            w_ih_r=_uinit(ks[8], (c, 4 * h), h), w_hh_r=_uinit(ks[9], (h, 4 * h), h),
            b_ih_r=_uinit(ks[10], (4 * h,), h), b_hh_r=_uinit(ks[11], (4 * h,), h),
        ),
        fc_w=_uinit(ks[12], (out_h, c), out_h), fc_b=_uinit(ks[13], (c,), out_h),
        ln2_g=jnp.ones((1, c), jnp.float32), ln2_b=jnp.zeros((1, c), jnp.float32),
        bidirectional=bidirectional,
    )


def init_separator_params(key, *, num_features, bottleneck_channels, hidden_channels,
                          chunk_size, hop_size, num_blocks, num_heads, causal, n_sources):
    del chunk_size, hop_size, num_heads
    c, f = bottleneck_channels, num_features
    keys = jax.random.split(key, 8 + 2 * num_blocks)
    return dict(
        bottleneck_w=_uinit(keys[0], (f, c), f), bottleneck_b=_uinit(keys[1], (c,), f),
        norm_gamma=jnp.ones((1, c, 1), jnp.float32), norm_beta=jnp.zeros((1, c, 1), jnp.float32),
        prelu_a=jnp.full((1,), 0.25, jnp.float32),
        map_w=_uinit(keys[2], (c, n_sources * f), c), map_b=_uinit(keys[3], (n_sources * f,), c),
        gtu_w1=_uinit(keys[4], (f, f), f), gtu_b1=_uinit(keys[5], (f,), f),
        gtu_w2=_uinit(keys[6], (f, f), f), gtu_b2=_uinit(keys[7], (f,), f),
        blocks=[
            dict(
                intra=init_transformer_params(keys[8 + 2 * i], c, hidden_channels, True),
                inter=init_transformer_params(keys[9 + 2 * i], c, hidden_channels, not causal),
            )
            for i in range(num_blocks)
        ],
    )


# -------------------------------------------------------------------------------- main
if __name__ == "__main__":
    cfg = dict(num_features=16, bottleneck_channels=16, hidden_channels=32,
               chunk_size=8, hop_size=4, num_blocks=2, num_heads=4,
               causal=True, n_sources=2)
    B, F_, T = 2, cfg["num_features"], 30

    key = jax.random.PRNGKey(0)
    pkey, xkey = jax.random.split(key)
    params = init_separator_params(pkey, **cfg)
    x = jax.random.normal(xkey, (B, F_, T), jnp.float32)

    out = separator_forward(params, cfg, x)
    out = jax.block_until_ready(out)

    assert out.shape == (B, cfg["n_sources"], F_, T), out.shape
    assert bool(jnp.all(jnp.isfinite(out)))
    print("KERNEL_OK")
</pallas_src>

<mosaic_0001>
module attributes {stable_mosaic.version = 11 : i64} {
  func.func @_linear_kernel(%arg0: i32, %arg1: memref<32x16xf32, #tpu.memory_space<vmem>>, %arg2: memref<16x16xbf16, #tpu.memory_space<vmem>>, %arg3: memref<1x16xf32, #tpu.memory_space<vmem>>, %arg4: memref<32x16xf32, #tpu.memory_space<vmem>>) attributes {dimension_semantics = [#tpu.dimension_semantics<parallel>], iteration_bounds = array<i64: 2>, scalar_prefetch = 0 : i64, scratch_operands = 0 : i64, tpu.core_type = #tpu.core_type<tc>, window_params = [{transform_indices = @transform_0, window_bounds = array<i64: 32, 16>}, {pipeline_mode = #tpu.pipeline_mode<synchronous>, transform_indices = @transform_1, window_bounds = array<i64: 16, 16>}, {pipeline_mode = #tpu.pipeline_mode<synchronous>, transform_indices = @transform_2, window_bounds = array<i64: 1, 16>}, {transform_indices = @transform_3, window_bounds = array<i64: 32, 16>}]} {
    %c0 = arith.constant 0 : index
    %c0_0 = arith.constant 0 : index
    %0 = vector.load %arg1[%c0, %c0_0] : memref<32x16xf32, #tpu.memory_space<vmem>>, vector<32x16xf32>
    %1 = arith.truncf %0 : vector<32x16xf32> to vector<32x16xbf16>
    %c0_1 = arith.constant 0 : index
    %c0_2 = arith.constant 0 : index
    %2 = vector.load %arg2[%c0_1, %c0_2] : memref<16x16xbf16, #tpu.memory_space<vmem>>, vector<16x16xbf16>
    %cst = arith.constant dense<0.000000e+00> : vector<32x16xf32>
    %3 = tpu.matmul %1, %2, %cst {dimension_numbers = #tpu.dot_dimension_numbers<[1], [0], [0], [1], [0, 0, 1, 1], [], []>} : vector<32x16xbf16>, vector<16x16xbf16>, vector<32x16xf32> -> vector<32x16xf32>
    %c0_3 = arith.constant 0 : index
    %c0_4 = arith.constant 0 : index
    %4 = vector.load %arg3[%c0_3, %c0_4] : memref<1x16xf32, #tpu.memory_space<vmem>>, vector<1x16xf32>
    %5 = vector.broadcast %4 : vector<1x16xf32> to vector<32x16xf32>
    %6 = arith.addf %3, %5 : vector<32x16xf32>
    %c0_5 = arith.constant 0 : index
    %c0_6 = arith.constant 0 : index
    %7 = vector.load %arg4[%c0_5, %c0_6] : memref<32x16xf32, #tpu.memory_space<vmem>>, vector<32x16xf32>
    tpu.vector_store %arg4[%c0_5, %c0_6], %6 {strides = array<i32>} : memref<32x16xf32, #tpu.memory_space<vmem>>, vector<32x16xf32>,
    return
  }
  func.func @transform_0(%arg0: i32) -> (i32, i32) {
    %c0_i32 = arith.constant 0 : i32
    %c0_i32_0 = arith.constant 0 : i32
    return %arg0, %c0_i32 : i32, i32
  }
  func.func @transform_1(%arg0: i32) -> (i32, i32) {
    %c0_i32 = arith.constant 0 : i32
    %c0_i32_0 = arith.constant 0 : i32
    %c0_i32_1 = arith.constant 0 : i32
    return %c0_i32, %c0_i32_0 : i32, i32
  }
  func.func @transform_2(%arg0: i32) -> (i32, i32) {
    %c0_i32 = arith.constant 0 : i32
    %c0_i32_0 = arith.constant 0 : i32
    %c0_i32_1 = arith.constant 0 : i32
    return %c0_i32, %c0_i32_0 : i32, i32
  }
  func.func @transform_3(%arg0: i32) -> (i32, i32) {
    %c0_i32 = arith.constant 0 : i32
    %c0_i32_0 = arith.constant 0 : i32
    return %arg0, %c0_i32 : i32, i32
  }
}

</mosaic_0001>

<llo_original>
// kernel: pallas_linear.1
$region0: #{pallas_linear.1}
  #allocation0 [shape = 'u32[]', space=smem, size = 0x4, offset = 0x4, fixed_abs, tag = 'smem constant byte address 0x4 - core index']
  #allocation1 [shape = 'u32[144,128]{1,0:T(1,128)}', space=vmem, size = 0x12000, scoped, tag = 'internal scratch']
  %s0 = inlined_call_operand.hbm [shape: f32[60,16], index: 0, kind: input, shape index: {}]
  %s1 = inlined_call_operand.hbm [shape: bf16[16,16], index: 1, kind: input, shape index: {}]
  %s2 = inlined_call_operand.hbm [shape: f32[1,16], index: 2, kind: input, shape index: {}]
  %s3 = inlined_call_operand.hbm [shape: f32[60,16], index: 3, kind: output, shape index: {}]
  %s4 = sld [smem:[#allocation0]]
  $region57: #{pallas_linear.1} parent=0
    _
  %s6 = ssub.s32 1, %s4
  %s7 = scalar_select 0, %s6, %s4
  $region1: #{pallas_linear.1} parent=0
    #allocation2 [shape = 'u8[32768]{0}', space=vmem, size = 0x8000, scoped, tag = 'input window, operand 0']
    #allocation3 [shape = 's32[2]{0}', space=sflag, size = 0x8, scoped, tag = 'scoped memory for pallas_linear.1']
    #allocation4 [shape = 's32[2]{0}', space=sflag, size = 0x8, scoped, tag = 'scoped memory for pallas_linear.1']
    #allocation5 [shape = 'u8[4096]{0}', space=vmem, size = 0x1000, scoped, tag = 'input window, operand 1, single buffered']
    #allocation6 [shape = 's32[1]{0}', space=sflag, size = 0x4, scoped, tag = 'scoped memory for pallas_linear.1']
    #allocation7 [shape = 'u8[512]{0}', space=vmem, size = 0x400, scoped, tag = 'input window, operand 2, single buffered']
    #allocation8 [shape = 'u8[32768]{0}', space=vmem, size = 0x8000, scoped, tag = 'output window, operand 0']
    %8 = vsyncpa [#allocation3], 0
    %s9 = scalar_lea.sflag [#allocation3], 1
    %10 = vsyncpa %s9, 0
    %11 = vsyncpa [#allocation6], 0
    %12 = vsyncpa [#allocation4], 0
    %s13 = scalar_lea.sflag [#allocation4], 1
    %14 = vsyncpa %s13, 0
    loop: start=0, step=1, limit=4
    $region2: #{pallas_linear.1} parent=1 // loop_pre_header
      _
    $region3: #{pallas_linear.1} parent=1 // loop_header
      %s16 = sphi 0, %s20
      %p17 = scmp.ge.s32.totalorder %s16, 4
      %s26 = sphi 0, %s28
      %s29 = sphi 0, %s26
      %s30 = sphi 0, %s29
      %s46 = sphi 0, %s30
      %s50 = sphi 0, %s50
      %s52 = sphi 0, %s50
      %s53 = sphi 0, %s52
      %s67 = sphi 0, %s53
      %s71 = sphi 0, %s71
      %s73 = sphi 0, %s71
      %s74 = sphi 0, %s73
      %s88 = sphi 0, %s74
      %s94 = sphi 0, %s96
      %s97 = sphi 0, %s94
      %s98 = sphi 0, %s97
      %s114 = sphi 0, %s98
    $region4: #{pallas_linear.1} parent=1 // loop_header_branch
      %19 = sbr.rel (%p17) target = $region8
    $region5: #{pallas_linear.1} parent=1 // loop_body
      %s21 = ssub.s32 %s16, 1
      %s22 = ssub.s32 %s16, 2
      %s23 = sadd.s32 %s16, 1
      %s24 = ssub.s32 %s16, %s23
      %p25 = scmp.eq.s32.totalorder %s24, 0
      %s27 = sadd.s32 %s26, 1
      %s28 = scalar_select %p25, %s26, %s27
      %p31 = pneg %p25
      %p32 = scmp.eq.s32.totalorder %s16, 1
      %p33 = por %p31, %p32
      %p34 = scmp.ne.s32.totalorder %s26, %s29
      %p35 = scmp.eq.s32.totalorder %s16, 0
      %p36 = por %p34, %p35
      %p37 = scmp.ne.s32.totalorder %s26, %s29
      %p38 = scmp.eq.s32.totalorder %s21, 1
      %p39 = por %p37, %p38
      %p40 = scmp.ne.s32.totalorder %s29, %s30
      %p41 = scmp.eq.s32.totalorder %s21, 0
      %p42 = por %p40, %p41
      %p43 = scmp.ne.s32.totalorder %s29, %s30
      %p44 = scmp.eq.s32.totalorder %s22, 1
      %p45 = por %p43, %p44
      %p47 = scmp.ne.s32.totalorder %s30, %s46
      %p48 = scmp.eq.s32.totalorder %s22, 0
      %p49 = por %p47, %p48
      %s51 = sadd.s32 %s50, 1
      %p54 = scmp.eq.s32.totalorder %s16, 1
      %p55 = scmp.ne.s32.totalorder %s50, %s52
      %p56 = scmp.eq.s32.totalorder %s16, 0
      %p57 = por %p55, %p56
      %p58 = scmp.ne.s32.totalorder %s50, %s52
      %p59 = scmp.eq.s32.totalorder %s21, 1
      %p60 = por %p58, %p59
      %p61 = scmp.ne.s32.totalorder %s52, %s53
      %p62 = scmp.eq.s32.totalorder %s21, 0
      %p63 = por %p61, %p62
      %p64 = scmp.ne.s32.totalorder %s52, %s53
      %p65 = scmp.eq.s32.totalorder %s22, 1
      %p66 = por %p64, %p65
      %p68 = scmp.ne.s32.totalorder %s53, %s67
      %p69 = scmp.eq.s32.totalorder %s22, 0
      %p70 = por %p68, %p69
      %s72 = sadd.s32 %s71, 1
      %p75 = scmp.eq.s32.totalorder %s16, 1
      %p76 = scmp.ne.s32.totalorder %s71, %s73
      %p77 = scmp.eq.s32.totalorder %s16, 0
      %p78 = por %p76, %p77
      %p79 = scmp.ne.s32.totalorder %s71, %s73
      %p80 = scmp.eq.s32.totalorder %s21, 1
      %p81 = por %p79, %p80
      %p82 = scmp.ne.s32.totalorder %s73, %s74
      %p83 = scmp.eq.s32.totalorder %s21, 0
      %p84 = por %p82, %p83
      %p85 = scmp.ne.s32.totalorder %s73, %s74
      %p86 = scmp.eq.s32.totalorder %s22, 1
      %p87 = por %p85, %p86
      %p89 = scmp.ne.s32.totalorder %s74, %s88
      %p90 = scmp.eq.s32.totalorder %s22, 0
      %p91 = por %p89, %p90
      %s92 = ssub.s32 %s16, %s23
      %p93 = scmp.eq.s32.totalorder %s92, 0
      %s95 = sadd.s32 %s94, 1
      %s96 = scalar_select %p93, %s94, %s95
      %p99 = pneg %p93
      %p100 = scmp.eq.s32.totalorder %s16, 1
      %p101 = por %p99, %p100
      %p102 = scmp.ne.s32.totalorder %s94, %s97
      %p103 = scmp.eq.s32.totalorder %s16, 0
      %p104 = por %p102, %p103
      %p105 = scmp.ne.s32.totalorder %s94, %s97
      %p106 = scmp.eq.s32.totalorder %s21, 1
      %p107 = por %p105, %p106
      %p108 = scmp.ne.s32.totalorder %s97, %s98
      %p109 = scmp.eq.s32.totalorder %s21, 0
      %p110 = por %p108, %p109
      %p111 = scmp.ne.s32.totalorder %s97, %s98
      %p112 = scmp.eq.s32.totalorder %s22, 1
      %p113 = por %p111, %p112
      %p115 = scmp.ne.s32.totalorder %s98, %s114
      %p116 = scmp.eq.s32.totalorder %s22, 0
      %p117 = por %p115, %p116
      %p118 = scmp.le.s32.totalorder 1, %s16
      %p119 = scmp.lt.s32.totalorder %s16, 3
      %p120 = pnand %p118, %p119
      %p121 = pneg %p120
      // Predicated region
      $region9: #{pallas_linear.1} parent=5 // pred_check
        _
      $region10: #{pallas_linear.1} parent=5 // pred_check_branch
        %123 = sbr.rel (%p120) target = $region12
      $region11: #{pallas_linear.1} parent=5 // pred_region
        %s124 = ssub.s32 %s16, 1
        // Predicated region
        $region13: #{pallas_linear.1} parent=11 // pred_check
          %p125 = pneg %p63
        $region14: #{pallas_linear.1} parent=11 // pred_check_branch
          %127 = sbr.rel (%p125) target = $region16
        $region15: #{pallas_linear.1} parent=11 // pred_region
          %s129 = ssub.s32 128, 128
          %130 = vsyncadd [#allocation6], %s129
          %s131 = sshll.u32 [#allocation5], 4
          %s132 = int_to_ptr.vmem [resolvable:$true] %s131
          %137 = dma.hbm_to_vmem [thread:$0]  %s1, 128, %s132, [#allocation6], 64, 64, 4
        $region16: #{pallas_linear.1} parent=11 // pred_fallthru
          _
        // Predicated region
        $region17: #{pallas_linear.1} parent=11 // pred_check
          %p138 = pneg %p84
        $region18: #{pallas_linear.1} parent=11 // pred_check_branch
          %140 = sbr.rel (%p138) target = $region20
        $region19: #{pallas_linear.1} parent=11 // pred_region
          %s142 = ssub.s32 16, 16
          %143 = vsyncadd [#allocation6], %s142
          %s145 = sshll.u32 [#allocation7], 4
          %s146 = int_to_ptr.vmem [resolvable:$true] %s145
          %148 = dma.hbm_to_vmem [thread:$0]  %s2, 16, %s146, [#allocation6]
        $region20: #{pallas_linear.1} parent=11 // pred_fallthru
          _
      $region12: #{pallas_linear.1} parent=5 // pred_fallthru
        _
      %p149 = scmp.lt.s32.totalorder %s16, 2
      // Predicated region
      $region21: #{pallas_linear.1} parent=5 // pred_check
        %p150 = pneg %p149
      $region22: #{pallas_linear.1} parent=5 // pred_check_branch
        %152 = sbr.rel (%p150) target = $region24
      $region23: #{pallas_linear.1} parent=5 // pred_region
        // Predicated region
        $region25: #{pallas_linear.1} parent=23 // pred_check
          %p153 = pneg %p36
        $region26: #{pallas_linear.1} parent=23 // pred_check_branch
          %155 = sbr.rel (%p153) target = $region28
        $region27: #{pallas_linear.1} parent=23 // pred_region
          %s156 = sand.u32 %s26, 1
          %s157 = scalar_lea.sflag [#allocation3], %s156
          %s158 = sand.u32 %s26, 1
          %s159 = smul.addr %s158, 32
          %s160 = scalar_lea.vmem [#allocation2], %s159
          %s161 = smul.u32 4, %s16
          %s163 = ssub.s32 512, 512
          %164 = vsyncadd %s157, %s163
          %s165 = smul.addr %s161, 128
          %s166 = scalar_lea.hbm %s0, %s165
          %s167 = sshll.u32 %s160, 4
          %s168 = int_to_ptr.vmem [resolvable:$true] %s167
          %173 = dma.hbm_to_vmem [thread:$0]  %s166, 512, %s168, %s157, 128, 128, 8
        $region28: #{pallas_linear.1} parent=23 // pred_fallthru
          _
      $region24: #{pallas_linear.1} parent=5 // pred_fallthru
        _
      %p174 = scmp.le.s32.totalorder 1, %s16
      %p175 = scmp.lt.s32.totalorder %s16, 3
      %p176 = pnand %p174, %p175
      %p177 = pneg %p176
      // Predicated region
      $region29: #{pallas_linear.1} parent=5 // pred_check
        _
      $region30: #{pallas_linear.1} parent=5 // pred_check_branch
        %179 = sbr.rel (%p176) target = $region32
      $region31: #{pallas_linear.1} parent=5 // pred_region
        %s180 = ssub.s32 %s16, 1
        %s181 = sand.u32 %s29, 1
        %s182 = scalar_lea.sflag [#allocation3], %s181
        %s183 = sand.u32 %s29, 1
        %s184 = smul.addr %s183, 32
        %s185 = scalar_lea.vmem [#allocation2], %s184
        // Predicated region
        $region33: #{pallas_linear.1} parent=31 // pred_check
          %p186 = pneg %p42
        $region34: #{pallas_linear.1} parent=31 // pred_check_branch
          %188 = sbr.rel (%p186) target = $region36
        $region35: #{pallas_linear.1} parent=31 // pred_region
          %189 = dma.done %s182, 512
        $region36: #{pallas_linear.1} parent=31 // pred_fallthru
          _
        // Predicated region
        $region37: #{pallas_linear.1} parent=31 // pred_check
          %p190 = pneg %p63
        $region38: #{pallas_linear.1} parent=31 // pred_check_branch
          %192 = sbr.rel (%p190) target = $region40
        $region39: #{pallas_linear.1} parent=31 // pred_region
          %193 = dma.done [#allocation6], 128
        $region40: #{pallas_linear.1} parent=31 // pred_fallthru
          _
        // Predicated region
        $region41: #{pallas_linear.1} parent=31 // pred_check
          %p194 = pneg %p84
        $region42: #{pallas_linear.1} parent=31 // pred_check_branch
          %196 = sbr.rel (%p194) target = $region44
        $region43: #{pallas_linear.1} parent=31 // pred_region
          %197 = dma.done [#allocation6], 16
        $region44: #{pallas_linear.1} parent=31 // pred_fallthru
          _
        %s198 = sand.u32 %s29, 1
        %s199 = scalar_lea.sflag [#allocation3], %s198
        %s200 = sand.u32 %s29, 1
        %s201 = smul.addr %s200, 32
        %s202 = scalar_lea.vmem [#allocation2], %s201
        %p203 = pneg %p42
        %p204 = pneg %p39
        %p205 = pneg %p63
        %p206 = pneg %p60
        %p207 = pneg %p84
        %p208 = pneg %p81
        %p209 = pneg %p110
        %p210 = pneg %p107
        %s211 = sand.u32 %s97, 1
        %s212 = scalar_lea.sflag [#allocation4], %s211
        %s213 = sand.u32 %s97, 1
        %s214 = smul.addr %s213, 32
        %s215 = scalar_lea.vmem [#allocation8], %s214
        %s216 = smul.u32 4, %s21
        %s217 = smul.u32 4, %s21
        %v219 = vld [vmem:[%s185] sm:$0xff]
        %v220 = vld [vmem:[%s185 + $0x8] sm:$0xff]
        %v221 = vld [vmem:[%s185 + $0x10] sm:$0xff]
        %v222 = vld [vmem:[%s185 + $0x18] sm:$0xff]
        %v223 = vpack.c.bf16 %v220, %v219
        %v224 = vpack.c.bf16 %v222, %v221
        %v225 = vld [vmem:[#allocation5] sm:$0xf]
        %v226 = vld [vmem:[#allocation5 + $0x4] sm:$0xf]
        %v227 = vld [vmem:[#allocation7] sm:$0x1]
        %v229 = vlaneseq
        %v230 = vshrl.u32 %v229, 7
        %v231 = vsub.s32 0, %v230
        %v232 = vrot.slane %v227, %v231
        %v236 = vunpack.c.l.b16 %v225
        %v237 = vunpack.c.l.b16 %v226
        %v238 = vpack.c.b16 %v237, %v236
        %vm240 = vcmask 130048
        %v242 = vsel %vm240, %v223, 0
        %v245 = vsel %vm240, %v224, 0
        %247 = vmatprep.subr.bf16.mxu0 0
        %248 = vmatpush1.bf16.msra.mxu0 %v238
        %249 = vmatprep.subr.bf16.mxu0 0
        %250 = vmatpush1.bf16.msra.mxu0 0
        %251 = vmatprep.subr.bf16.mxu0 0
        %252 = vmatpush1.bf16.msra.mxu0 0
        %253 = vmatprep.subr.bf16.mxu0 0
        %254 = vmatpush1.bf16.msra.mxu0 0
        %255 = vmatprep.subr.bf16.mxu0 0
        %256 = vmatpush1.bf16.msra.mxu0 0
        %257 = vmatprep.subr.bf16.mxu0 0
        %258 = vmatpush1.bf16.msra.mxu0 0
        %259 = vmatprep.subr.bf16.mxu0 0
        %260 = vmatpush1.bf16.msra.mxu0 0
        %261 = vmatprep.subr.bf16.mxu0 0
        %262 = vmatpush1.bf16.msra.mxu0 0
        %263 = vmatprep.subr.bf16.mxu0 0
        %264 = vmatpush1.bf16.msra.mxu0 0
        %265 = vmatprep.subr.bf16.mxu0 0
        %266 = vmatpush1.bf16.msra.mxu0 0
        %267 = vmatprep.subr.bf16.mxu0 0
        %268 = vmatpush1.bf16.msra.mxu0 0
        %269 = vmatprep.subr.bf16.mxu0 0
        %270 = vmatpush1.bf16.msra.mxu0 0
        %271 = vmatprep.subr.bf16.mxu0 0
        %272 = vmatpush1.bf16.msra.mxu0 0
        %273 = vmatprep.subr.bf16.mxu0 0
        %274 = vmatpush1.bf16.msra.mxu0 0
        %275 = vmatprep.subr.bf16.mxu0 0
        %276 = vmatpush1.bf16.msra.mxu0 0
        %277 = vmatprep.subr.bf16.mxu0 0
        %278 = vmatpush1.bf16.msra.mxu0 0
        %279 = vmatprep.mubr.bf16.mxu0 0
        %280 = vmatmul.mubr.bf16.gmra.mrb[0].mxu0 %v242
        %v281 = vpop.f32.mrb[0].mxu0
        %v282 = vadd.f32 %v232, %v281
        %v283 = vpop.f32.mrb[0].mxu0
        %v284 = vpop.f32.mrb[0].mxu0
        %v285 = vadd.f32 %v232, %v284
        %v286 = vpop.f32.mrb[0].mxu0
        %287 = vmatprep.mubr.bf16.mxu0 0
        %288 = vmatmul.mubr.bf16.gmra.mrb[0].mxu0 %v245
        %v289 = vpop.f32.mrb[0].mxu0
        %v290 = vadd.f32 %v232, %v289
        %v291 = vpop.f32.mrb[0].mxu0
        %v292 = vpop.f32.mrb[0].mxu0
        %v293 = vadd.f32 %v232, %v292
        %v294 = vpop.f32.mrb[0].mxu0
        %295 = vdwg.mxu0
        %296 = vst.msk [vmem:[%s215] sm:$0xff] %vm240, %v282
        %297 = vst.msk [vmem:[%s215 + $0x8] sm:$0xff] %vm240, %v285
        %298 = vst.msk [vmem:[%s215 + $0x10] sm:$0xff] %vm240, %v290
        %299 = vst.msk [vmem:[%s215 + $0x18] sm:$0xff] %vm240, %v293
        %s300 = sand.u32 %s97, 1
        %s301 = scalar_lea.sflag [#allocation4], %s300
        %s302 = sand.u32 %s97, 1
        %s303 = smul.addr %s302, 32
        %s304 = scalar_lea.vmem [#allocation8], %s303
        // Predicated region
        $region45: #{pallas_linear.1} parent=31 // pred_check
          %p305 = pneg %p107
        $region46: #{pallas_linear.1} parent=31 // pred_check_branch
          %307 = sbr.rel (%p305) target = $region48
        $region47: #{pallas_linear.1} parent=31 // pred_region
          %s308 = smul.u32 4, %s21
          %s310 = ssub.s32 512, 512
          %311 = vsyncadd %s301, %s310
          %s312 = smul.addr %s308, 128
          %s313 = scalar_lea.hbm %s3, %s312
          %s314 = sshll.u32 %s304, 4
          %s315 = int_to_ptr.vmem [resolvable:$true] %s314
          %320 = dma.vmem_to_hbm [thread:$0]  %s315, 512, %s313, %s301, 128, 128, 8
        $region48: #{pallas_linear.1} parent=31 // pred_fallthru
          _
      $region32: #{pallas_linear.1} parent=5 // pred_fallthru
        _
      %p321 = scmp.le.s32.totalorder 2, %s16
      // Predicated region
      $region49: #{pallas_linear.1} parent=5 // pred_check
        %p322 = pneg %p321
      $region50: #{pallas_linear.1} parent=5 // pred_check_branch
        %324 = sbr.rel (%p322) target = $region52
      $region51: #{pallas_linear.1} parent=5 // pred_region
        %s325 = ssub.s32 %s16, 2
        // Predicated region
        $region53: #{pallas_linear.1} parent=51 // pred_check
          %p326 = pneg %p113
        $region54: #{pallas_linear.1} parent=51 // pred_check_branch
          %328 = sbr.rel (%p326) target = $region56
        $region55: #{pallas_linear.1} parent=51 // pred_region
          %s329 = sand.u32 %s98, 1
          %s330 = scalar_lea.sflag [#allocation4], %s329
          %s331 = sand.u32 %s98, 1
          %s332 = smul.addr %s331, 32
          %s333 = scalar_lea.vmem [#allocation8], %s332
          %334 = dma.done %s330, 512
        $region56: #{pallas_linear.1} parent=51 // pred_fallthru
          _
      $region52: #{pallas_linear.1} parent=5 // pred_fallthru
        _
    $region6: #{pallas_linear.1} parent=1 // loop_footer
      %s20 = sadd.s32 1, %s16
    $region7: #{pallas_linear.1} parent=1 // loop_footer_branch
      %15 = sbr.rel target = $region3
    $region8: #{pallas_linear.1} parent=1 // loop_exit
      _
    %335 = vsyncpa [#allocation3], 1
    %s336 = scalar_lea.sflag [#allocation3], 1
    %337 = vsyncpa %s336, 1
    %338 = vsyncpa [#allocation6], 1
    %339 = vsyncpa [#allocation4], 1
    %s340 = scalar_lea.sflag [#allocation4], 1
    %341 = vsyncpa %s340, 1

</llo_original>
